<compile_context>
chip_gen: v5e
topology: v5e:2x2
jax: 0.10.0
libtpu: 0.0.40
codegen_flags: <defaults>
</compile_context>

<pallas_src>
import functools

import jax
import jax.numpy as jnp
from jax.experimental import pallas as pl
from jax.experimental.pallas import tpu as pltpu

_INV16 = 1.0 / 16.0
_SMALL_BYTES = 2 * 1024 * 1024        # below this: ungridded whole-volume path
_MAX_TX = 512                         # rows per block (multiple of 8)
_MAX_BLOCK_BYTES = 2 * 1024 * 1024    # cap per-block VMEM footprint


# ----------------------------------------------------------------------------
# Small-volume path: whole (X, Y*Z) volume resident in VMEM, no grid.
# ----------------------------------------------------------------------------
def _smooth_small_kernel(u_ref, o_ref, *, x_len, y_len, z_len):
    """Separable circular 3x3 smoothing on the whole (X, Y*Z) volume."""
    u = u_ref[...]

    # X pass [1,2,1], circular, via sublane rolls (XLU slot). Accumulate in
    # place to keep at most ~2 full-array temporaries live (VMEM footprint).
    t = u + u
    t = t + pltpu.roll(u, 1, axis=0)            # u[(i-1) mod X]
    t = t + pltpu.roll(u, x_len - 1, axis=0)    # u[(i+1) mod X]

    # Y pass [1,2,1], circular: (Y,Z) flattened on lanes -> lane roll by +/-Z.
    s = t + t
    s = s + pltpu.roll(t, z_len, axis=1)                # t[:, (y-1) mod Y, z]
    s = s + pltpu.roll(t, (y_len - 1) * z_len, axis=1)  # t[:, (y+1) mod Y, z]

    o_ref[...] = s * jnp.float32(_INV16)        # bias == 0, scale folded here


# ----------------------------------------------------------------------------
# Large-volume path: X-tiled grid with a 2-row circular halo DMA per block.
# ----------------------------------------------------------------------------
def _smooth_tiled_kernel(u_blk_ref, u_hbm_ref, o_ref, halo_buf, halo_sem, *,
                         x_len, y_len, z_len, tx):
    """One (tx, Y*Z) block; halo rows fetched from the pl.ANY alias of u."""
    i = pl.program_id(0)
    base = i * tx
    top = (base + x_len - 1) % x_len      # global row index of the -1 halo
    bot = (base + tx) % x_len             # global row index of the +1 halo

    # Issue the 2-row halo DMA immediately; its latency hides under the
    # block's Y-pass compute below.
    top_cp = pltpu.make_async_copy(u_hbm_ref.at[pl.ds(top, 1)],
                                   halo_buf.at[pl.ds(0, 1)], halo_sem.at[0])
    bot_cp = pltpu.make_async_copy(u_hbm_ref.at[pl.ds(bot, 1)],
                                   halo_buf.at[pl.ds(1, 1)], halo_sem.at[1])
    top_cp.start()
    bot_cp.start()

    def ypass(v):
        # [1,2,1] circular over Y via lane rolls by +/-Z on the flat (Y,Z) axis.
        r = v + v
        r = r + pltpu.roll(v, z_len, axis=1)
        r = r + pltpu.roll(v, (y_len - 1) * z_len, axis=1)
        return r

    # Separable filter commutes: do Y first (bulk of the compute), then X.
    t = ypass(u_blk_ref[...])

    # X pass with in-block circular wrap; rows 0 and tx-1 are wrong (they need
    # the cross-block halo) and are overwritten below.
    s = t + t
    s = s + pltpu.roll(t, 1, axis=0)
    s = s + pltpu.roll(t, tx - 1, axis=0)
    o_ref[...] = s * jnp.float32(_INV16)

    # Halo rows have arrived by now; fix up the two boundary output rows.
    top_cp.wait()
    bot_cp.wait()
    row0 = ypass(u_blk_ref[0:1, :])
    row1 = ypass(u_blk_ref[1:2, :])
    rowm1 = ypass(u_blk_ref[tx - 1:tx, :])
    rowm2 = ypass(u_blk_ref[tx - 2:tx - 1, :])
    halo_t = ypass(halo_buf[0:1, :])
    halo_b = ypass(halo_buf[1:2, :])
    o_ref[0:1, :] = (halo_t + row0 + row0 + row1) * jnp.float32(_INV16)
    o_ref[tx - 1:tx, :] = (rowm2 + rowm1 + rowm1 + halo_b) * jnp.float32(_INV16)


def _tiled_call(u2, x_len, y_len, z_len, tx):
    yz = y_len * z_len
    kernel = functools.partial(_smooth_tiled_kernel, x_len=x_len, y_len=y_len,
                               z_len=z_len, tx=tx)
    return pl.pallas_call(
        kernel,
        out_shape=jax.ShapeDtypeStruct((x_len, yz), jnp.float32),
        grid=(x_len // tx,),
        in_specs=[
            pl.BlockSpec((tx, yz), lambda i: (i, 0)),   # bulk: auto-pipelined
            pl.BlockSpec(memory_space=pl.ANY),          # same array, HBM view
        ],
        out_specs=pl.BlockSpec((tx, yz), lambda i: (i, 0)),
        scratch_shapes=[
            pltpu.VMEM((2, yz), jnp.float32),           # [top halo; bottom halo]
            pltpu.SemaphoreType.DMA((2,)),
        ],
        compiler_params=pltpu.CompilerParams(
            # Step-local halo logic only -> safe to split the X axis across
            # TensorCores on v7x.
            dimension_semantics=("parallel",),
            vmem_limit_bytes=32 * 1024 * 1024,
        ),
    )(u2, u2)


def _pick_tile(x_len, yz):
    """Largest TX (multiple of 8, <= _MAX_TX, block <= ~2 MiB) dividing X."""
    row_bytes = max(yz * 4, 1)
    cap = min(_MAX_TX, max(8, _MAX_BLOCK_BYTES // row_bytes))
    best = None
    for tx in range(8, min(cap, x_len) + 1, 8):
        if x_len % tx == 0:
            best = tx
    return best


@jax.jit
def sp_filter_3d_temp(u):
    """u: (1, X, Y, Z) float32 -> (1, X, Y, Z) float32."""
    original_shape = u.shape
    u3 = jnp.squeeze(u, axis=0)            # (X, Y, Z)
    X, Y, Z = u3.shape
    YZ = Y * Z
    u2 = u3.reshape(X, YZ)                 # free metadata reshape, lane-dense

    tx = _pick_tile(X, YZ)
    total_bytes = X * YZ * 4
    if total_bytes > _SMALL_BYTES and tx is not None and tx < X:
        out = _tiled_call(u2, X, Y, Z, tx)
    else:
        # TODO(synk): volumes too large for VMEM whose X has no multiple-of-8
        # divisor would need a masked/ragged last tile; they fall back here.
        out = pl.pallas_call(
            functools.partial(_smooth_small_kernel, x_len=X, y_len=Y, z_len=Z),
            out_shape=jax.ShapeDtypeStruct((X, YZ), jnp.float32),
            in_specs=[pl.BlockSpec(memory_space=pltpu.MemorySpace.VMEM)],
            out_specs=pl.BlockSpec(memory_space=pltpu.MemorySpace.VMEM),
            compiler_params=pltpu.CompilerParams(
                vmem_limit_bytes=32 * 1024 * 1024),
        )(u2)

    return out.reshape(original_shape)


# ----------------------------------------------------------------------------
# Pure-JAX reference (full 9-tap circular conv) for validation.
# ----------------------------------------------------------------------------
def _reference(u):
    w = jnp.array(
        [[1.0, 2.0, 1.0],
         [2.0, 4.0, 2.0],
         [1.0, 2.0, 1.0]], dtype=jnp.float32) / 16.0
    bias = jnp.zeros((1,), dtype=jnp.float32)
    u3 = jnp.squeeze(u, axis=0)
    acc = jnp.zeros_like(u3)
    for kd in range(3):
        for kh in range(3):
            shifted = jnp.roll(jnp.roll(u3, 1 - kd, axis=0), 1 - kh, axis=1)
            acc = acc + w[kd, kh] * shifted
    return (acc + bias[0]).reshape(u.shape)


if __name__ == "__main__":
    key = jax.random.PRNGKey(0)
    k1, k2 = jax.random.split(key)

    # 1) Small volume -> whole-volume (no-grid) path.
    u_small = jax.random.normal(k1, (1, 16, 16, 8), dtype=jnp.float32)
    out_small = jax.block_until_ready(sp_filter_3d_temp(u_small))
    assert out_small.shape == u_small.shape and out_small.dtype == jnp.float32
    ref_small = _reference(u_small)
    assert jnp.allclose(out_small, ref_small, atol=1e-5, rtol=1e-5), float(
        jnp.max(jnp.abs(out_small - ref_small)))

    # 2) Larger volume -> X-tiled path (TX=512, grid=4) with circular halo DMA.
    u_big = jax.random.normal(k2, (1, 2048, 32, 16), dtype=jnp.float32)
    out_big = jax.block_until_ready(sp_filter_3d_temp(u_big))
    assert out_big.shape == u_big.shape and out_big.dtype == jnp.float32
    ref_big = _reference(u_big)
    assert jnp.allclose(out_big, ref_big, atol=1e-5, rtol=1e-5), float(
        jnp.max(jnp.abs(out_big - ref_big)))

    print("KERNEL_OK")
</pallas_src>

<mosaic_0001>
module attributes {stable_mosaic.version = 11 : i64} {
  func.func @_smooth_small_kernel(%arg0: memref<16x128xf32, #tpu.memory_space<vmem>>, %arg1: memref<16x128xf32, #tpu.memory_space<vmem>>) attributes {dimension_semantics = [], scalar_prefetch = 0 : i64, scratch_operands = 0 : i64, tpu.core_type = #tpu.core_type<tc>} {
    %c0 = arith.constant 0 : index
    %c0_0 = arith.constant 0 : index
    %0 = vector.load %arg0[%c0, %c0_0] : memref<16x128xf32, #tpu.memory_space<vmem>>, vector<16x128xf32>
    %1 = arith.addf %0, %0 : vector<16x128xf32>
    %c1_i32 = arith.constant 1 : i32
    %2 = tpu.dynamic_rotate %0 by %c1_i32 dim 0 : vector<16x128xf32>, i32 -> vector<16x128xf32>
    %3 = arith.addf %1, %2 : vector<16x128xf32>
    %c15_i32 = arith.constant 15 : i32
    %4 = tpu.dynamic_rotate %0 by %c15_i32 dim 0 : vector<16x128xf32>, i32 -> vector<16x128xf32>
    %5 = arith.addf %3, %4 : vector<16x128xf32>
    %6 = arith.addf %5, %5 : vector<16x128xf32>
    %c8_i32 = arith.constant 8 : i32
    %7 = tpu.dynamic_rotate %5 by %c8_i32 dim 1 : vector<16x128xf32>, i32 -> vector<16x128xf32>
    %8 = arith.addf %6, %7 : vector<16x128xf32>
    %c120_i32 = arith.constant 120 : i32
    %9 = tpu.dynamic_rotate %5 by %c120_i32 dim 1 : vector<16x128xf32>, i32 -> vector<16x128xf32>
    %10 = arith.addf %8, %9 : vector<16x128xf32>
    %cst = arith.constant 6.250000e-02 : f32
    %11 = vector.broadcast %cst : f32 to vector<16x128xf32>
    %12 = arith.mulf %10, %11 : vector<16x128xf32>
    %c0_1 = arith.constant 0 : index
    %c0_2 = arith.constant 0 : index
    %13 = vector.load %arg1[%c0_1, %c0_2] : memref<16x128xf32, #tpu.memory_space<vmem>>, vector<16x128xf32>
    tpu.vector_store %arg1[%c0_1, %c0_2], %12 {strides = array<i32>} : memref<16x128xf32, #tpu.memory_space<vmem>>, vector<16x128xf32>,
    return
  }
}

</mosaic_0001>

<llo_original>
// kernel: sp_filter_3d_temp.1
$region0: #{sp_filter_3d_temp.1}
  #allocation0 [shape = 'u32[]', space=smem, size = 0x4, offset = 0x4, fixed_abs, tag = 'smem constant byte address 0x4 - core index']
  #allocation1 [shape = 'u32[72,128]{1,0:T(1,128)}', space=vmem, size = 0x9000, scoped, tag = 'internal scratch']
  %s0 = inlined_call_operand.vmem [shape: f32[16,128], index: 0, kind: input, shape index: {}]
  %s1 = inlined_call_operand.vmem [shape: f32[16,128], index: 1, kind: output, shape index: {}]
  %s2 = sld [smem:[#allocation0]]
  $region14: #{sp_filter_3d_temp.1} parent=0
    _
  %s4 = ssub.s32 1, %s2
  %s5 = scalar_select 0, %s4, %s2
  // Predicated region
  $region2: #{sp_filter_3d_temp.1} parent=0 // pred_check
    _
  $region3: #{sp_filter_3d_temp.1} parent=0 // pred_check_branch
    %7 = sbr.rel (0) target = $region5
  $region4: #{sp_filter_3d_temp.1} parent=0 // pred_region
    _
  $region5: #{sp_filter_3d_temp.1} parent=0 // pred_fallthru
    _
  %v8 = vld [vmem:[%s0] sm:$0xff]
  %v9 = vld [vmem:[%s0 + $0x8] sm:$0xff]
  %v10 = vadd.f32 %v8, %v8
  %v11 = vadd.f32 %v9, %v9
  %v12 = vrot.slane %v8, 7
  %v13 = vrot.slane %v9, 7
  %v14 = vlaneseq
  %v15 = vshrl.u32 %v14, 7
  %vm16 = vcmp.lt.s32.totalorder %v15, 1
  %v17 = vsel %vm16, %v12, %v13
  %v18 = vsel %vm16, %v13, %v12
  %v19 = vadd.f32 %v10, %v18
  %v20 = vadd.f32 %v11, %v17
  %v21 = vrot.slane %v8, 1
  %v22 = vrot.slane %v9, 1
  %vm23 = vcmp.lt.s32.totalorder %v15, 7
  %v24 = vsel %vm23, %v21, %v22
  %v25 = vsel %vm23, %v22, %v21
  %v26 = vadd.f32 %v19, %v24
  %v27 = vadd.f32 %v20, %v25
  %v28 = vadd.f32 %v26, %v26
  %v29 = vadd.f32 %v27, %v27
  %30 = vrot.lane.b32.xlu0 %v26, 8
  %v31 = vpop.permute.xlu0 %30
  %32 = vrot.lane.b32.xlu0 %v27, 8
  %v33 = vpop.permute.xlu0 %32
  %v34 = vadd.f32 %v28, %v31
  %v35 = vadd.f32 %v29, %v33
  %36 = vrot.lane.b32.xlu0 %v26, 120
  %v37 = vpop.permute.xlu0 %36
  %38 = vrot.lane.b32.xlu0 %v27, 120
  %v39 = vpop.permute.xlu0 %38
  %v40 = vadd.f32 %v34, %v37
  %v41 = vadd.f32 %v35, %v39
  %v42 = vmul.f32 %v40, 0.0625
  %v43 = vmul.f32 %v41, 0.0625
  %44 = vst [vmem:[%s1] sm:$0xff] %v42
  %45 = vst [vmem:[%s1 + $0x8] sm:$0xff] %v43
  // Predicated region
  $region6: #{sp_filter_3d_temp.1} parent=0 // pred_check
    _
  $region7: #{sp_filter_3d_temp.1} parent=0 // pred_check_branch
    %47 = sbr.rel (0) target = $region9
  $region8: #{sp_filter_3d_temp.1} parent=0 // pred_region
    _
  $region9: #{sp_filter_3d_temp.1} parent=0 // pred_fallthru
    _
  // Predicated region
  $region10: #{sp_filter_3d_temp.1} parent=0 // pred_check
    _
  $region11: #{sp_filter_3d_temp.1} parent=0 // pred_check_branch
    %49 = sbr.rel (0) target = $region13
  $region12: #{sp_filter_3d_temp.1} parent=0 // pred_region
    _
  $region13: #{sp_filter_3d_temp.1} parent=0 // pred_fallthru
    _

</llo_original>
